<compile_context>
chip_gen: v7x
topology: tpu7x:2x2x1
jax: 0.10.0
libtpu: 0.0.40
codegen_flags: <defaults>
</compile_context>

<pallas_src>
import functools

import jax
import jax.numpy as jnp
from jax import lax
from jax.experimental import pallas as pl
from jax.experimental.pallas import tpu as pltpu


def _round_up(a, b):
    return (a + b - 1) // b * b


def _ccf_mlp_kernel(x_ref, w1_ref, b1_ref, w2_ref, b2_ref, wct_ref, bct_ref,
                    out_ref, *, n_class_rows):
    """Fused MLP + transposed classifier head + logsumexp for one batch tile.

    x_ref  : (TILE_B, D_in) f32 (streamed per grid step; cast to bf16 here)
    w1_ref : (D_in, H) bf16     b1_ref : (1, H) f32
    w2_ref : (H, H)    bf16     b2_ref : (1, H) f32
    wct_ref: (C_pad=128, H) bf16  (pre-transposed head; pad rows are zero)
    bct_ref: (C_pad, 1) f32       (pad rows = -1e30)
    out_ref: (1, TILE_B) f32      lane-dense logsumexp row for this tile
    """
    # Cast the streamed f32 x tile to bf16 in-VMEM (VPU work, hidden under DMA).
    x = x_ref[...].astype(jnp.bfloat16)                               # (TB, D)

    # Layer 1: Linear + ReLU (f32 accumulation on the MXU).
    h = jnp.dot(x, w1_ref[...], preferred_element_type=jnp.float32) + b1_ref[...]
    h = jnp.maximum(h, 0.0).astype(jnp.bfloat16)                      # (TB, H)

    # Extra layer: Linear + ReLU.
    h = jnp.dot(h, w2_ref[...], preferred_element_type=jnp.float32) + b2_ref[...]
    h = jnp.maximum(h, 0.0).astype(jnp.bfloat16)                      # (TB, H)

    # Transposed head: logits_T[c, b] = sum_h wct[c, h] * h[b, h].
    # NT matmul on the MXU (contract both minor dims) -- no explicit transpose,
    # result already has batch on the lane axis.
    logits_t = lax.dot_general(
        wct_ref[...], h, (((1,), (1,)), ((), ())),
        preferred_element_type=jnp.float32) + bct_ref[...]            # (C_pad, TB)

    # Keep only sublane rows holding real classes (pad rows are -1e30: they
    # cannot win the f32 max and their exp underflows to 0).
    lt = logits_t[:n_class_rows, :]                                   # (rows, TB)

    # Numerically-stable logsumexp over the class (sublane) axis.
    m = jnp.max(lt, axis=0, keepdims=True)                            # (1, TB)
    s = jnp.sum(jnp.exp(lt - m), axis=0, keepdims=True)               # (1, TB)
    out_ref[...] = m + jnp.log(s)


def ccf_forward(x_nchw, params, *, max_tile_b=4096):
    """CCF.forward(x, y=None). Returns logsumexp(logits, axis=1), shape (B,)."""
    w1, b1, w2, b2, wc, bc = params
    B = x_nchw.shape[0]
    # Flatten NCHW -> (B, C*H*W); contiguous reshape, no extra HBM pass.
    x2d = x_nchw.reshape(B, -1)
    d_in = x2d.shape[1]
    hidden = w1.shape[1]
    n_classes = wc.shape[1]

    # Pad classes to one full 128-lane tile (as sublanes of the transposed head).
    c_pad = 128
    assert n_classes <= c_pad, "more classes than one lane tile not supported"
    n_class_rows = _round_up(n_classes, 8)
    wct = jnp.zeros((c_pad, hidden), jnp.bfloat16).at[:n_classes, :].set(
        jnp.transpose(wc).astype(jnp.bfloat16))
    bct = jnp.full((c_pad, 1), -1e30, jnp.float32).at[:n_classes, 0].set(
        bc.reshape(-1).astype(jnp.float32))

    # Batch tile: >= 2 grid steps once B > 128 (megacore/double-buffering),
    # capped by max_tile_b and a ~16 MiB budget for the double-buffered f32
    # x block.  No padding of B -- the last block may be partial; garbage rows
    # only affect masked-off output columns >= B.
    vmem_x_budget = 16 * 1024 * 1024
    vmem_cap = max(128, (vmem_x_budget // (2 * 4 * d_in)) // 128 * 128)
    tile_b = max(128, min(max_tile_b, _round_up(pl.cdiv(B, 2), 128), vmem_cap))
    num_tiles = pl.cdiv(B, tile_b)

    weight_bytes = ((d_in * hidden + hidden * hidden + c_pad * hidden) * 2
                    + (2 * hidden + c_pad) * 4)
    cost = pl.CostEstimate(
        flops=2 * B * (d_in * hidden + hidden * hidden + hidden * c_pad),
        transcendentals=B * (n_class_rows + 1),          # exps + per-sample log
        bytes_accessed=B * d_in * 4 + weight_bytes + B * 4)

    kernel = functools.partial(_ccf_mlp_kernel, n_class_rows=n_class_rows)

    out = pl.pallas_call(
        kernel,
        out_shape=jax.ShapeDtypeStruct((1, B), jnp.float32),
        grid=(num_tiles,),
        in_specs=[
            pl.BlockSpec((tile_b, d_in), lambda i: (i, 0)),   # x: streamed per tile
            pl.BlockSpec((d_in, hidden), lambda i: (0, 0)),   # weights: VMEM-resident
            pl.BlockSpec((1, hidden), lambda i: (0, 0)),
            pl.BlockSpec((hidden, hidden), lambda i: (0, 0)),
            pl.BlockSpec((1, hidden), lambda i: (0, 0)),
            pl.BlockSpec((c_pad, hidden), lambda i: (0, 0)),  # pre-transposed head
            pl.BlockSpec((c_pad, 1), lambda i: (0, 0)),
        ],
        out_specs=pl.BlockSpec((1, tile_b), lambda i: (0, i)),  # lane-dense row
        compiler_params=pltpu.CompilerParams(
            dimension_semantics=("parallel",),    # shard batch grid over TCs (v7x)
            vmem_limit_bytes=48 * 1024 * 1024),
        cost_estimate=cost,
    )(x2d,
      w1.astype(jnp.bfloat16), b1.astype(jnp.float32),
      w2.astype(jnp.bfloat16), b2.astype(jnp.float32),
      wct, bct)

    return out[0]   # (B,)


def init_params(key, input_size, hidden, n_classes):
    """Deterministic parameter init; shapes follow the PyTorch module (f32)."""
    k1, k2, k3, k4, k5, k6 = jax.random.split(key, 6)

    def linear(kw, kb, fan_in, fan_out):
        # PyTorch nn.Linear default: U(-1/sqrt(fan_in), 1/sqrt(fan_in))
        lim = 1.0 / jnp.sqrt(jnp.float32(fan_in))
        w = jax.random.uniform(kw, (fan_in, fan_out), jnp.float32, -lim, lim)
        b = jax.random.uniform(kb, (1, fan_out), jnp.float32, -lim, lim)
        return w, b

    w1, b1 = linear(k1, k2, input_size, hidden)   # NeuralNet layer_in
    w2, b2 = linear(k3, k4, hidden, hidden)       # extra layer
    wc, bc = linear(k5, k6, hidden, n_classes)    # F.class_output
    return (w1, b1, w2, b2, wc, bc)


if __name__ == "__main__":
    # Small, module-consistent shapes: batch=2, n_ch=1, im_sz=16,
    # hidden=32, extra_layers=1, n_classes=10.
    B, C, H, W = 2, 1, 16, 16
    HIDDEN, N_CLASSES = 32, 10
    INPUT_SIZE = C * H * W

    key = jax.random.PRNGKey(0)
    kx, kp = jax.random.split(key)
    x = jax.random.normal(kx, (B, C, H, W), dtype=jnp.float32)
    params = init_params(kp, INPUT_SIZE, HIDDEN, N_CLASSES)

    out = ccf_forward(x, params)
    out = jax.block_until_ready(out)
    assert out.shape == (B,)

    # Sanity check against a plain-jnp reference with matching bf16 rounding.
    w1, b1, w2, b2, wc, bc = params
    xr = x.reshape(B, -1).astype(jnp.bfloat16).astype(jnp.float32)
    hr = jnp.maximum(xr @ w1.astype(jnp.bfloat16).astype(jnp.float32) + b1, 0.0)
    hr = hr.astype(jnp.bfloat16).astype(jnp.float32)
    hr = jnp.maximum(hr @ w2.astype(jnp.bfloat16).astype(jnp.float32) + b2, 0.0)
    hr = hr.astype(jnp.bfloat16).astype(jnp.float32)
    lg = hr @ wc.astype(jnp.bfloat16).astype(jnp.float32) + bc
    mref = jnp.max(lg, axis=1)
    ref = mref + jnp.log(jnp.sum(jnp.exp(lg - mref[:, None]), axis=1))
    assert jnp.allclose(out, ref, rtol=1e-1, atol=1e-1), (out, ref)

    print("KERNEL_OK")
</pallas_src>

<mosaic_0001>
module attributes {stable_mosaic.version = 11 : i64} {
  func.func @_ccf_mlp_kernel(%arg0: i32, %arg1: memref<128x256xf32, #tpu.memory_space<vmem>>, %arg2: memref<256x32xbf16, #tpu.memory_space<vmem>>, %arg3: memref<1x32xf32, #tpu.memory_space<vmem>>, %arg4: memref<32x32xbf16, #tpu.memory_space<vmem>>, %arg5: memref<1x32xf32, #tpu.memory_space<vmem>>, %arg6: memref<128x32xbf16, #tpu.memory_space<vmem>>, %arg7: memref<128x1xf32, #tpu.memory_space<vmem>>, %arg8: memref<1x128xf32, #tpu.memory_space<vmem>>) attributes {dimension_semantics = [#tpu.dimension_semantics<parallel>], iteration_bounds = array<i64: 1>, scalar_prefetch = 0 : i64, scratch_operands = 0 : i64, tpu.core_type = #tpu.core_type<tc>, window_params = [{transform_indices = @transform_0, window_bounds = array<i64: 128, 256>}, {pipeline_mode = #tpu.pipeline_mode<synchronous>, transform_indices = @transform_1, window_bounds = array<i64: 256, 32>}, {pipeline_mode = #tpu.pipeline_mode<synchronous>, transform_indices = @transform_2, window_bounds = array<i64: 1, 32>}, {pipeline_mode = #tpu.pipeline_mode<synchronous>, transform_indices = @transform_3, window_bounds = array<i64: 32, 32>}, {pipeline_mode = #tpu.pipeline_mode<synchronous>, transform_indices = @transform_4, window_bounds = array<i64: 1, 32>}, {pipeline_mode = #tpu.pipeline_mode<synchronous>, transform_indices = @transform_5, window_bounds = array<i64: 128, 32>}, {pipeline_mode = #tpu.pipeline_mode<synchronous>, transform_indices = @transform_6, window_bounds = array<i64: 128, 1>}, {transform_indices = @transform_7, window_bounds = array<i64: 1, 128>}]} {
    %c0 = arith.constant 0 : index
    %c0_0 = arith.constant 0 : index
    %0 = vector.load %arg1[%c0, %c0_0] : memref<128x256xf32, #tpu.memory_space<vmem>>, vector<128x256xf32>
    %1 = arith.truncf %0 : vector<128x256xf32> to vector<128x256xbf16>
    %c0_1 = arith.constant 0 : index
    %c0_2 = arith.constant 0 : index
    %2 = vector.load %arg2[%c0_1, %c0_2] : memref<256x32xbf16, #tpu.memory_space<vmem>>, vector<256x32xbf16>
    %cst = arith.constant dense<0.000000e+00> : vector<128x32xf32>
    %3 = tpu.matmul %1, %2, %cst {dimension_numbers = #tpu.dot_dimension_numbers<[1], [0], [0], [1], [0, 0, 1, 1], [], []>} : vector<128x256xbf16>, vector<256x32xbf16>, vector<128x32xf32> -> vector<128x32xf32>
    %c0_3 = arith.constant 0 : index
    %c0_4 = arith.constant 0 : index
    %4 = vector.load %arg3[%c0_3, %c0_4] : memref<1x32xf32, #tpu.memory_space<vmem>>, vector<1x32xf32>
    %5 = vector.broadcast %4 : vector<1x32xf32> to vector<128x32xf32>
    %6 = arith.addf %3, %5 : vector<128x32xf32>
    %cst_5 = arith.constant 0.000000e+00 : f32
    %7 = vector.broadcast %cst_5 : f32 to vector<128x32xf32>
    %8 = arith.maximumf %6, %7 : vector<128x32xf32>
    %9 = arith.truncf %8 : vector<128x32xf32> to vector<128x32xbf16>
    %c0_6 = arith.constant 0 : index
    %c0_7 = arith.constant 0 : index
    %10 = vector.load %arg4[%c0_6, %c0_7] : memref<32x32xbf16, #tpu.memory_space<vmem>>, vector<32x32xbf16>
    %cst_8 = arith.constant dense<0.000000e+00> : vector<128x32xf32>
    %11 = tpu.matmul %9, %10, %cst_8 {dimension_numbers = #tpu.dot_dimension_numbers<[1], [0], [0], [1], [0, 0, 1, 1], [], []>} : vector<128x32xbf16>, vector<32x32xbf16>, vector<128x32xf32> -> vector<128x32xf32>
    %c0_9 = arith.constant 0 : index
    %c0_10 = arith.constant 0 : index
    %12 = vector.load %arg5[%c0_9, %c0_10] : memref<1x32xf32, #tpu.memory_space<vmem>>, vector<1x32xf32>
    %13 = vector.broadcast %12 : vector<1x32xf32> to vector<128x32xf32>
    %14 = arith.addf %11, %13 : vector<128x32xf32>
    %cst_11 = arith.constant 0.000000e+00 : f32
    %15 = vector.broadcast %cst_11 : f32 to vector<128x32xf32>
    %16 = arith.maximumf %14, %15 : vector<128x32xf32>
    %17 = arith.truncf %16 : vector<128x32xf32> to vector<128x32xbf16>
    %c0_12 = arith.constant 0 : index
    %c0_13 = arith.constant 0 : index
    %18 = vector.load %arg6[%c0_12, %c0_13] : memref<128x32xbf16, #tpu.memory_space<vmem>>, vector<128x32xbf16>
    %cst_14 = arith.constant dense<0.000000e+00> : vector<128x128xf32>
    %19 = tpu.matmul %18, %17, %cst_14 {dimension_numbers = #tpu.dot_dimension_numbers<[1], [1], [0], [0], [0, 0, 1, 0], [], []>} : vector<128x32xbf16>, vector<128x32xbf16>, vector<128x128xf32> -> vector<128x128xf32>
    %c0_15 = arith.constant 0 : index
    %c0_16 = arith.constant 0 : index
    %20 = vector.load %arg7[%c0_15, %c0_16] : memref<128x1xf32, #tpu.memory_space<vmem>>, vector<128x1xf32>
    %21 = vector.broadcast %20 : vector<128x1xf32> to vector<128x128xf32>
    %22 = arith.addf %19, %21 : vector<128x128xf32>
    %23 = vector.extract_strided_slice %22 {offsets = [0, 0], sizes = [16, 128], strides = [1, 1]} : vector<128x128xf32> to vector<16x128xf32>
    %cst_17 = arith.constant dense<0xFF800000> : vector<128xf32>
    %24 = vector.multi_reduction <maximumf>, %23, %cst_17 [0] : vector<16x128xf32> to vector<128xf32>
    %25 = vector.shape_cast %24 : vector<128xf32> to vector<1x128xf32>
    %26 = vector.broadcast %25 : vector<1x128xf32> to vector<16x128xf32>
    %27 = arith.subf %23, %26 : vector<16x128xf32>
    %28 = math.exp %27 : vector<16x128xf32>
    %cst_18 = arith.constant dense<0.000000e+00> : vector<128xf32>
    %29 = vector.multi_reduction <add>, %28, %cst_18 [0] : vector<16x128xf32> to vector<128xf32>
    %30 = vector.shape_cast %29 : vector<128xf32> to vector<1x128xf32>
    %31 = math.log %30 : vector<1x128xf32>
    %32 = arith.addf %25, %31 : vector<1x128xf32>
    %c0_19 = arith.constant 0 : index
    %c0_20 = arith.constant 0 : index
    %33 = vector.load %arg8[%c0_19, %c0_20] : memref<1x128xf32, #tpu.memory_space<vmem>>, vector<1x128xf32>
    tpu.vector_store %arg8[%c0_19, %c0_20], %32 {strides = array<i32>} : memref<1x128xf32, #tpu.memory_space<vmem>>, vector<1x128xf32>,
    return
  }
  func.func @transform_0(%arg0: i32) -> (i32, i32) {
    %c0_i32 = arith.constant 0 : i32
    %c0_i32_0 = arith.constant 0 : i32
    return %arg0, %c0_i32 : i32, i32
  }
  func.func @transform_1(%arg0: i32) -> (i32, i32) {
    %c0_i32 = arith.constant 0 : i32
    %c0_i32_0 = arith.constant 0 : i32
    %c0_i32_1 = arith.constant 0 : i32
    return %c0_i32, %c0_i32_0 : i32, i32
  }
  func.func @transform_2(%arg0: i32) -> (i32, i32) {
    %c0_i32 = arith.constant 0 : i32
    %c0_i32_0 = arith.constant 0 : i32
    %c0_i32_1 = arith.constant 0 : i32
    return %c0_i32, %c0_i32_0 : i32, i32
  }
  func.func @transform_3(%arg0: i32) -> (i32, i32) {
    %c0_i32 = arith.constant 0 : i32
    %c0_i32_0 = arith.constant 0 : i32
    %c0_i32_1 = arith.constant 0 : i32
    return %c0_i32, %c0_i32_0 : i32, i32
  }
  func.func @transform_4(%arg0: i32) -> (i32, i32) {
    %c0_i32 = arith.constant 0 : i32
    %c0_i32_0 = arith.constant 0 : i32
    %c0_i32_1 = arith.constant 0 : i32
    return %c0_i32, %c0_i32_0 : i32, i32
  }
  func.func @transform_5(%arg0: i32) -> (i32, i32) {
    %c0_i32 = arith.constant 0 : i32
    %c0_i32_0 = arith.constant 0 : i32
    %c0_i32_1 = arith.constant 0 : i32
    return %c0_i32, %c0_i32_0 : i32, i32
  }
  func.func @transform_6(%arg0: i32) -> (i32, i32) {
    %c0_i32 = arith.constant 0 : i32
    %c0_i32_0 = arith.constant 0 : i32
    %c0_i32_1 = arith.constant 0 : i32
    return %c0_i32, %c0_i32_0 : i32, i32
  }
  func.func @transform_7(%arg0: i32) -> (i32, i32) {
    %c0_i32 = arith.constant 0 : i32
    %c0_i32_0 = arith.constant 0 : i32
    return %c0_i32, %arg0 : i32, i32
  }
}

</mosaic_0001>

<llo_original>
// kernel: tpu_custom_call.1
$region0: #{tpu_custom_call.1}
  #allocation0 [shape = 'u32[]', space=smem, size = 0x4, offset = 0x4, fixed_abs, tag = 'smem constant byte address 0x4 - core index']
  #allocation1 [shape = 'u32[144,128]{1,0:T(1,128)}', space=vmem, size = 0x12000, scoped, tag = 'internal scratch']
  %s0 = inlined_call_operand.vmem [shape: f32[2,256], index: 0, kind: input, shape index: {}]
  %s1 = inlined_call_operand.vmem [shape: bf16[256,32], index: 1, kind: input, shape index: {}]
  %s2 = inlined_call_operand.vmem [shape: f32[1,32], index: 2, kind: input, shape index: {}]
  %s3 = inlined_call_operand.vmem [shape: bf16[32,32], index: 3, kind: input, shape index: {}]
  %s4 = inlined_call_operand.vmem [shape: f32[1,32], index: 4, kind: input, shape index: {}]
  %s5 = inlined_call_operand.vmem [shape: bf16[128,32], index: 5, kind: input, shape index: {}]
  %s6 = inlined_call_operand.vmem [shape: f32[128,1], index: 6, kind: input, shape index: {}]
  %s7 = inlined_call_operand.hbm [shape: f32[1,2], index: 7, kind: output, shape index: {}]
  %s8 = sld [smem:[#allocation0]]
  $region38: #{tpu_custom_call.1} parent=0
    _
  %s10 = ssub.s32 1, %s8
  %s11 = scalar_select 0, %s10, %s8
  $region1: #{tpu_custom_call.1} parent=0
    #allocation2 [shape = 'u8[512]{0}', space=vmem, size = 0x400, scoped, tag = 'output window, operand 0, single buffered']
    #allocation3 [shape = 's32[1]{0}', space=sflag, size = 0x4, scoped, tag = 'scoped memory for tpu_custom_call.1']
    %12 = vsyncpa [#allocation3], 0
    // Predicated region
    $region2: #{tpu_custom_call.1} parent=1 // pred_check
      _
    $region3: #{tpu_custom_call.1} parent=1 // pred_check_branch
      %14 = sbr.rel (0) target = $region5
    $region4: #{tpu_custom_call.1} parent=1 // pred_region
      _
    $region5: #{tpu_custom_call.1} parent=1 // pred_fallthru
      _
    // Predicated region
    $region6: #{tpu_custom_call.1} parent=1 // pred_check
      _
    $region7: #{tpu_custom_call.1} parent=1 // pred_check_branch
      %16 = sbr.rel (0) target = $region9
    $region8: #{tpu_custom_call.1} parent=1 // pred_region
      _
    $region9: #{tpu_custom_call.1} parent=1 // pred_fallthru
      _
    // Predicated region
    $region10: #{tpu_custom_call.1} parent=1 // pred_check
      _
    $region11: #{tpu_custom_call.1} parent=1 // pred_check_branch
      %18 = sbr.rel (0) target = $region13
    $region12: #{tpu_custom_call.1} parent=1 // pred_region
      _
    $region13: #{tpu_custom_call.1} parent=1 // pred_fallthru
      _
    // Predicated region
    $region14: #{tpu_custom_call.1} parent=1 // pred_check
      _
    $region15: #{tpu_custom_call.1} parent=1 // pred_check_branch
      %20 = sbr.rel (0) target = $region17
    $region16: #{tpu_custom_call.1} parent=1 // pred_region
      _
    $region17: #{tpu_custom_call.1} parent=1 // pred_fallthru
      _
    // Predicated region
    $region18: #{tpu_custom_call.1} parent=1 // pred_check
      _
    $region19: #{tpu_custom_call.1} parent=1 // pred_check_branch
      %22 = sbr.rel (0) target = $region21
    $region20: #{tpu_custom_call.1} parent=1 // pred_region
      _
    $region21: #{tpu_custom_call.1} parent=1 // pred_fallthru
      _
    // Predicated region
    $region22: #{tpu_custom_call.1} parent=1 // pred_check
      _
    $region23: #{tpu_custom_call.1} parent=1 // pred_check_branch
      %24 = sbr.rel (0) target = $region25
    $region24: #{tpu_custom_call.1} parent=1 // pred_region
      _
    $region25: #{tpu_custom_call.1} parent=1 // pred_fallthru
      _
    // Predicated region
    $region26: #{tpu_custom_call.1} parent=1 // pred_check
      _
    $region27: #{tpu_custom_call.1} parent=1 // pred_check_branch
      %26 = sbr.rel (0) target = $region29
    $region28: #{tpu_custom_call.1} parent=1 // pred_region
      _
    $region29: #{tpu_custom_call.1} parent=1 // pred_fallthru
      _
    %v28 = vld [vmem:[%s0] sm:$0xf]
    %v29 = vld [vmem:[%s0 + $0x4] sm:$0xf]
    %v30 = vld [vmem:[%s0 + $0x8] sm:$0xf]
    %v31 = vld [vmem:[%s0 + $0xc] sm:$0xf]
    %v32 = vld [vmem:[%s0 + $0x10] sm:$0xf]
    %v33 = vld [vmem:[%s0 + $0x14] sm:$0xf]
    %v34 = vld [vmem:[%s0 + $0x18] sm:$0xf]
    %v35 = vld [vmem:[%s0 + $0x1c] sm:$0xf]
    %v36 = vld [vmem:[%s0 + $0x20] sm:$0xf]
    %v37 = vld [vmem:[%s0 + $0x24] sm:$0xf]
    %v38 = vld [vmem:[%s0 + $0x28] sm:$0xf]
    %v39 = vld [vmem:[%s0 + $0x2c] sm:$0xf]
    %v40 = vld [vmem:[%s0 + $0x30] sm:$0xf]
    %v41 = vld [vmem:[%s0 + $0x34] sm:$0xf]
    %v42 = vld [vmem:[%s0 + $0x38] sm:$0xf]
    %v43 = vld [vmem:[%s0 + $0x3c] sm:$0xf]
    %v44 = vld [vmem:[%s0 + $0x40] sm:$0xf]
    %v45 = vld [vmem:[%s0 + $0x44] sm:$0xf]
    %v46 = vld [vmem:[%s0 + $0x48] sm:$0xf]
    %v47 = vld [vmem:[%s0 + $0x4c] sm:$0xf]
    %v48 = vld [vmem:[%s0 + $0x50] sm:$0xf]
    %v49 = vld [vmem:[%s0 + $0x54] sm:$0xf]
    %v50 = vld [vmem:[%s0 + $0x58] sm:$0xf]
    %v51 = vld [vmem:[%s0 + $0x5c] sm:$0xf]
    %v52 = vld [vmem:[%s0 + $0x60] sm:$0xf]
    %v53 = vld [vmem:[%s0 + $0x64] sm:$0xf]
    %v54 = vld [vmem:[%s0 + $0x68] sm:$0xf]
    %v55 = vld [vmem:[%s0 + $0x6c] sm:$0xf]
    %v56 = vld [vmem:[%s0 + $0x70] sm:$0xf]
    %v57 = vld [vmem:[%s0 + $0x74] sm:$0xf]
    %v58 = vld [vmem:[%s0 + $0x78] sm:$0xf]
    %v59 = vld [vmem:[%s0 + $0x7c] sm:$0xf]
    %v60 = vld [vmem:[%s0 + $0x80] sm:$0xf]
    %v61 = vld [vmem:[%s0 + $0x84] sm:$0xf]
    %v62 = vld [vmem:[%s0 + $0x88] sm:$0xf]
    %v63 = vld [vmem:[%s0 + $0x8c] sm:$0xf]
    %v64 = vld [vmem:[%s0 + $0x90] sm:$0xf]
    %v65 = vld [vmem:[%s0 + $0x94] sm:$0xf]
    %v66 = vld [vmem:[%s0 + $0x98] sm:$0xf]
    %v67 = vld [vmem:[%s0 + $0x9c] sm:$0xf]
    %v68 = vld [vmem:[%s0 + $0xa0] sm:$0xf]
    %v69 = vld [vmem:[%s0 + $0xa4] sm:$0xf]
    %v70 = vld [vmem:[%s0 + $0xa8] sm:$0xf]
    %v71 = vld [vmem:[%s0 + $0xac] sm:$0xf]
    %v72 = vld [vmem:[%s0 + $0xb0] sm:$0xf]
    %v73 = vld [vmem:[%s0 + $0xb4] sm:$0xf]
    %v74 = vld [vmem:[%s0 + $0xb8] sm:$0xf]
    %v75 = vld [vmem:[%s0 + $0xbc] sm:$0xf]
    %v76 = vld [vmem:[%s0 + $0xc0] sm:$0xf]
    %v77 = vld [vmem:[%s0 + $0xc4] sm:$0xf]
    %v78 = vld [vmem:[%s0 + $0xc8] sm:$0xf]
    %v79 = vld [vmem:[%s0 + $0xcc] sm:$0xf]
    %v80 = vld [vmem:[%s0 + $0xd0] sm:$0xf]
    %v81 = vld [vmem:[%s0 + $0xd4] sm:$0xf]
    %v82 = vld [vmem:[%s0 + $0xd8] sm:$0xf]
    %v83 = vld [vmem:[%s0 + $0xdc] sm:$0xf]
    %v84 = vld [vmem:[%s0 + $0xe0] sm:$0xf]
    %v85 = vld [vmem:[%s0 + $0xe4] sm:$0xf]
    %v86 = vld [vmem:[%s0 + $0xe8] sm:$0xf]
    %v87 = vld [vmem:[%s0 + $0xec] sm:$0xf]
    %v88 = vld [vmem:[%s0 + $0xf0] sm:$0xf]
    %v89 = vld [vmem:[%s0 + $0xf4] sm:$0xf]
    %v90 = vld [vmem:[%s0 + $0xf8] sm:$0xf]
    %v91 = vld [vmem:[%s0 + $0xfc] sm:$0xf]
    %v156 = vcombine.low %v28, %v29
    %v157 = vcombine.low %v30, %v31
    %v159 = vunpack.c.l.s4 1983009808
    %v160 = vunpack.c.0.s8 %v159
    %v161 = vlaneseq
    %v162 = vshrl.u32 %v161, 7
    %v163 = vsub.s32 %v160, %v162
    %v164 = vrot.slane %v156, %v163
    %v166 = vunpack.c.l.s4 1983009808
    %v167 = vunpack.c.0.s8 %v166
    %v168 = vlaneseq
    %v169 = vshrl.u32 %v168, 7
    %v170 = vsub.s32 %v167, %v169
    %v171 = vrot.slane %v157, %v170
    %v172 = vcombine.low %v164, %v171
    %v173 = vcombine.high %v164, %v171
    %v174 = vcombine.low %v32, %v33
    %v175 = vcombine.low %v34, %v35
    %v177 = vunpack.c.l.s4 1983009808
    %v178 = vunpack.c.0.s8 %v177
    %v179 = vlaneseq
    %v180 = vshrl.u32 %v179, 7
    %v181 = vsub.s32 %v178, %v180
    %v182 = vrot.slane %v174, %v181
    %v184 = vunpack.c.l.s4 1983009808
    %v185 = vunpack.c.0.s8 %v184
    %v186 = vlaneseq
    %v187 = vshrl.u32 %v186, 7
    %v188 = vsub.s32 %v185, %v187
    %v189 = vrot.slane %v175, %v188
    %v190 = vcombine.low %v182, %v189
    %v191 = vcombine.high %v182, %v189
    %v192 = vcombine.low %v36, %v37
    %v193 = vcombine.low %v38, %v39
    %v195 = vunpack.c.l.s4 1983009808
    %v196 = vunpack.c.0.s8 %v195
    %v197 = vlaneseq
    %v198 = vshrl.u32 %v197, 7
    %v199 = vsub.s32 %v196, %v198
    %v200 = vrot.slane %v192, %v199
    %v202 = vunpack.c.l.s4 1983009808
    %v203 = vunpack.c.0.s8 %v202
    %v204 = vlaneseq
    %v205 = vshrl.u32 %v204, 7
    %v206 = vsub.s32 %v203, %v205
    %v207 = vrot.slane %v193, %v206
    %v208 = vcombine.low %v200, %v207
    %v209 = vcombine.high %v200, %v207
    %v210 = vcombine.low %v40, %v41
    %v211 = vcombine.low %v42, %v43
    %v213 = vunpack.c.l.s4 1983009808
    %v214 = vunpack.c.0.s8 %v213
    %v215 = vlaneseq
    %v216 = vshrl.u32 %v215, 7
    %v217 = vsub.s32 %v214, %v216
    %v218 = vrot.slane %v210, %v217
    %v220 = vunpack.c.l.s4 1983009808
    %v221 = vunpack.c.0.s8 %v220
    %v222 = vlaneseq
    %v223 = vshrl.u32 %v222, 7
    %v224 = vsub.s32 %v221, %v223
    %v225 = vrot.slane %v211, %v224
    %v226 = vcombine.low %v218, %v225
    %v227 = vcombine.high %v218, %v225
    %v228 = vcombine.low %v44, %v45
    %v229 = vcombine.low %v46, %v47
    %v231 = vunpack.c.l.s4 1983009808
    %v232 = vunpack.c.0.s8 %v231
    %v233 = vlaneseq
    %v234 = vshrl.u32 %v233, 7
    %v235 = vsub.s32 %v232, %v234
    %v236 = vrot.slane %v228, %v235
    %v238 = vunpack.c.l.s4 1983009808
    %v239 = vunpack.c.0.s8 %v238
    %v240 = vlaneseq
    %v241 = vshrl.u32 %v240, 7
    %v242 = vsub.s32 %v239, %v241
    %v243 = vrot.slane %v229, %v242
    %v244 = vcombine.low %v236, %v243
    %v245 = vcombine.high %v236, %v243
    %v246 = vcombine.low %v48, %v49
    %v247 = vcombine.low %v50, %v51
    %v249 = vunpack.c.l.s4 1983009808
    %v250 = vunpack.c.0.s8 %v249
    %v251 = vlaneseq
    %v252 = vshrl.u32 %v251, 7
    %v253 = vsub.s32 %v250, %v252
    %v254 = vrot.slane %v246, %v253
    %v256 = vunpack.c.l.s4 1983009808
    %v257 = vunpack.c.0.s8 %v256
    %v258 = vlaneseq
    %v259 = vshrl.u32 %v258, 7
    %v260 = vsub.s32 %v257, %v259
    %v261 = vrot.slane %v247, %v260
    %v262 = vcombine.low %v254, %v261
    %v263 = vcombine.high %v254, %v261
    %v264 = vcombine.low %v52, %v53
    %v265 = vcombine.low %v54, %v55
    %v267 = vunpack.c.l.s4 1983009808
    %v268 = vunpack.c.0.s8 %v267
    %v269 = vlaneseq
    %v270 = vshrl.u32 %v269, 7
    %v271 = vsub.s32 %v268, %v270
    %v272 = vrot.slane %v264, %v271
    %v274 = vunpack.c.l.s4 1983009808
    %v275 = vunpack.c.0.s8 %v274
    %v276 = vlaneseq
    %v277 = vshrl.u32 %v276, 7
    %v278 = vsub.s32 %v275, %v277
    %v279 = vrot.slane %v265, %v278
    %v280 = vcombine.low %v272, %v279
    %v281 = vcombine.high %v272, %v279
    %v282 = vcombine.low %v56, %v57
    %v283 = vcombine.low %v58, %v59
    %v285 = vunpack.c.l.s4 1983009808
    %v286 = vunpack.c.0.s8 %v285
    %v287 = vlaneseq
    %v288 = vshrl.u32 %v287, 7
    %v289 = vsub.s32 %v286, %v288
    %v290 = vrot.slane %v282, %v289
    %v292 = vunpack.c.l.s4 1983009808
    %v293 = vunpack.c.0.s8 %v292
    %v294 = vlaneseq
    %v295 = vshrl.u32 %v294, 7
    %v296 = vsub.s32 %v293, %v295
    %v297 = vrot.slane %v283, %v296
    %v298 = vcombine.low %v290, %v297
    %v299 = vcombine.high %v290, %v297
    %v300 = vcombine.low %v60, %v61
    %v301 = vcombine.low %v62, %v63
    %v303 = vunpack.c.l.s4 1983009808
    %v304 = vunpack.c.0.s8 %v303
    %v305 = vlaneseq
    %v306 = vshrl.u32 %v305, 7
    %v307 = vsub.s32 %v304, %v306
    %v308 = vrot.slane %v300, %v307
    %v310 = vunpack.c.l.s4 1983009808
    %v311 = vunpack.c.0.s8 %v310
    %v312 = vlaneseq
    %v313 = vshrl.u32 %v312, 7
    %v314 = vsub.s32 %v311, %v313
    %v315 = vrot.slane %v301, %v314
    %v316 = vcombine.low %v308, %v315
    %v317 = vcombine.high %v308, %v315
    %v318 = vcombine.low %v64, %v65
    %v319 = vcombine.low %v66, %v67
    %v321 = vunpack.c.l.s4 1983009808
    %v322 = vunpack.c.0.s8 %v321
    %v323 = vlaneseq
    %v324 = vshrl.u32 %v323, 7
    %v325 = vsub.s32 %v322, %v324
    %v326 = vrot.slane %v318, %v325
    %v328 = vunpack.c.l.s4 1983009808
    %v329 = vunpack.c.0.s8 %v328
    %v330 = vlaneseq
    %v331 = vshrl.u32 %v330, 7
    %v332 = vsub.s32 %v329, %v331
    %v333 = vrot.slane %v319, %v332
    %v334 = vcombine.low %v326, %v333
    %v335 = vcombine.high %v326, %v333
    %v336 = vcombine.low %v68, %v69
    %v337 = vcombine.low %v70, %v71
    %v339 = vunpack.c.l.s4 1983009808
    %v340 = vunpack.c.0.s8 %v339
    %v341 = vlaneseq
    %v342 = vshrl.u32 %v341, 7
    %v343 = vsub.s32 %v340, %v342
    %v344 = vrot.slane %v336, %v343
    %v346 = vunpack.c.l.s4 1983009808
    %v347 = vunpack.c.0.s8 %v346
    %v348 = vlaneseq
    %v349 = vshrl.u32 %v348, 7
    %v350 = vsub.s32 %v347, %v349
    %v351 = vrot.slane %v337, %v350
    %v352 = vcombine.low %v344, %v351
    %v353 = vcombine.high %v344, %v351
    %v354 = vcombine.low %v72, %v73
    %v355 = vcombine.low %v74, %v75
    %v357 = vunpack.c.l.s4 1983009808
    %v358 = vunpack.c.0.s8 %v357
    %v359 = vlaneseq
    %v360 = vshrl.u32 %v359, 7
    %v361 = vsub.s32 %v358, %v360
    %v362 = vrot.slane %v354, %v361
    %v364 = vunpack.c.l.s4 1983009808
    %v365 = vunpack.c.0.s8 %v364
    %v366 = vlaneseq
    %v367 = vshrl.u32 %v366, 7
    %v368 = vsub.s32 %v365, %v367
    %v369 = vrot.slane %v355, %v368
    %v370 = vcombine.low %v362, %v369
    %v371 = vcombine.high %v362, %v369
    %v372 = vcombine.low %v76, %v77
    %v373 = vcombine.low %v78, %v79
    %v375 = vunpack.c.l.s4 1983009808
    %v376 = vunpack.c.0.s8 %v375
    %v377 = vlaneseq
    %v378 = vshrl.u32 %v377, 7
    %v379 = vsub.s32 %v376, %v378
    %v380 = vrot.slane %v372, %v379
    %v382 = vunpack.c.l.s4 1983009808
    %v383 = vunpack.c.0.s8 %v382
    %v384 = vlaneseq
    %v385 = vshrl.u32 %v384, 7
    %v386 = vsub.s32 %v383, %v385
    %v387 = vrot.slane %v373, %v386
    %v388 = vcombine.low %v380, %v387
    %v389 = vcombine.high %v380, %v387
    %v390 = vcombine.low %v80, %v81
    %v391 = vcombine.low %v82, %v83
    %v393 = vunpack.c.l.s4 1983009808
    %v394 = vunpack.c.0.s8 %v393
    %v395 = vlaneseq
    %v396 = vshrl.u32 %v395, 7
    %v397 = vsub.s32 %v394, %v396
    %v398 = vrot.slane %v390, %v397
    %v400 = vunpack.c.l.s4 1983009808
    %v401 = vunpack.c.0.s8 %v400
    %v402 = vlaneseq
    %v403 = vshrl.u32 %v402, 7
    %v404 = vsub.s32 %v401, %v403
    %v405 = vrot.slane %v391, %v404
    %v406 = vcombine.low %v398, %v405
    %v407 = vcombine.high %v398, %v405
    %v408 = vcombine.low %v84, %v85
    %v409 = vcombine.low %v86, %v87
    %v411 = vunpack.c.l.s4 1983009808
    %v412 = vunpack.c.0.s8 %v411
    %v413 = vlaneseq
    %v414 = vshrl.u32 %v413, 7
    %v415 = vsub.s32 %v412, %v414
    %v416 = vrot.slane %v408, %v415
    %v418 = vunpack.c.l.s4 1983009808
    %v419 = vunpack.c.0.s8 %v418
    %v420 = vlaneseq
    %v421 = vshrl.u32 %v420, 7
    %v422 = vsub.s32 %v419, %v421
    %v423 = vrot.slane %v409, %v422
    %v424 = vcombine.low %v416, %v423
    %v425 = vcombine.high %v416, %v423
    %v426 = vcombine.low %v88, %v89
    %v427 = vcombine.low %v90, %v91
    %v429 = vunpack.c.l.s4 1983009808
    %v430 = vunpack.c.0.s8 %v429
    %v431 = vlaneseq
    %v432 = vshrl.u32 %v431, 7
    %v433 = vsub.s32 %v430, %v432
    %v434 = vrot.slane %v426, %v433
    %v436 = vunpack.c.l.s4 1983009808
    %v437 = vunpack.c.0.s8 %v436
    %v438 = vlaneseq
    %v439 = vshrl.u32 %v438, 7
    %v440 = vsub.s32 %v437, %v439
    %v441 = vrot.slane %v427, %v440
    %v442 = vcombine.low %v434, %v441
    %v443 = vcombine.high %v434, %v441
    %v476 = vpack.c.bf16 %v190, %v172
    %v477 = vpack.c.bf16 %v191, %v173
    %v478 = vpack.c.bf16 %v226, %v208
    %v479 = vpack.c.bf16 %v227, %v209
    %v480 = vpack.c.bf16 %v262, %v244
    %v481 = vpack.c.bf16 %v263, %v245
    %v482 = vpack.c.bf16 %v298, %v280
    %v483 = vpack.c.bf16 %v299, %v281
    %v484 = vpack.c.bf16 %v334, %v316
    %v485 = vpack.c.bf16 %v335, %v317
    %v486 = vpack.c.bf16 %v370, %v352
    %v487 = vpack.c.bf16 %v371, %v353
    %v488 = vpack.c.bf16 %v406, %v388
    %v489 = vpack.c.bf16 %v407, %v389
    %v490 = vpack.c.bf16 %v442, %v424
    %v491 = vpack.c.bf16 %v443, %v425
    %v492 = vld [vmem:[%s1] sm:$0xf]
    %v493 = vld [vmem:[%s1 + $0x4] sm:$0xf]
    %v494 = vld [vmem:[%s1 + $0x8] sm:$0xf]
    %v495 = vld [vmem:[%s1 + $0xc] sm:$0xf]
    %v496 = vld [vmem:[%s1 + $0x10] sm:$0xf]
    %v497 = vld [vmem:[%s1 + $0x14] sm:$0xf]
    %v498 = vld [vmem:[%s1 + $0x18] sm:$0xf]
    %v499 = vld [vmem:[%s1 + $0x1c] sm:$0xf]
    %v500 = vld [vmem:[%s1 + $0x20] sm:$0xf]
    %v501 = vld [vmem:[%s1 + $0x24] sm:$0xf]
    %v502 = vld [vmem:[%s1 + $0x28] sm:$0xf]
    %v503 = vld [vmem:[%s1 + $0x2c] sm:$0xf]
    %v504 = vld [vmem:[%s1 + $0x30] sm:$0xf]
    %v505 = vld [vmem:[%s1 + $0x34] sm:$0xf]
    %v506 = vld [vmem:[%s1 + $0x38] sm:$0xf]
    %v507 = vld [vmem:[%s1 + $0x3c] sm:$0xf]
    %v508 = vld [vmem:[%s1 + $0x40] sm:$0xf]
    %v509 = vld [vmem:[%s1 + $0x44] sm:$0xf]
    %v510 = vld [vmem:[%s1 + $0x48] sm:$0xf]
    %v511 = vld [vmem:[%s1 + $0x4c] sm:$0xf]
    %v512 = vld [vmem:[%s1 + $0x50] sm:$0xf]
    %v513 = vld [vmem:[%s1 + $0x54] sm:$0xf]
    %v514 = vld [vmem:[%s1 + $0x58] sm:$0xf]
    %v515 = vld [vmem:[%s1 + $0x5c] sm:$0xf]
    %v516 = vld [vmem:[%s1 + $0x60] sm:$0xf]
    %v517 = vld [vmem:[%s1 + $0x64] sm:$0xf]
    %v518 = vld [vmem:[%s1 + $0x68] sm:$0xf]
    %v519 = vld [vmem:[%s1 + $0x6c] sm:$0xf]
    %v520 = vld [vmem:[%s1 + $0x70] sm:$0xf]
    %v521 = vld [vmem:[%s1 + $0x74] sm:$0xf]
    %v522 = vld [vmem:[%s1 + $0x78] sm:$0xf]
    %v523 = vld [vmem:[%s1 + $0x7c] sm:$0xf]
    %v524 = vld [vmem:[%s2] sm:$0x1]
    %v526 = vlaneseq
    %v527 = vshrl.u32 %v526, 7
    %v528 = vsub.s32 0, %v527
    %v529 = vrot.slane %v524, %v528
    %v563 = vunpack.c.l.b16 %v492
    %v564 = vunpack.c.l.b16 %v493
    %v565 = vunpack.c.l.b16 %v494
    %v566 = vunpack.c.l.b16 %v495
    %v567 = vunpack.c.l.b16 %v496
    %v568 = vunpack.c.l.b16 %v497
    %v569 = vunpack.c.l.b16 %v498
    %v570 = vunpack.c.l.b16 %v499
    %v571 = vunpack.c.l.b16 %v500
    %v572 = vunpack.c.l.b16 %v501
    %v573 = vunpack.c.l.b16 %v502
    %v574 = vunpack.c.l.b16 %v503
    %v575 = vunpack.c.l.b16 %v504
    %v576 = vunpack.c.l.b16 %v505
    %v577 = vunpack.c.l.b16 %v506
    %v578 = vunpack.c.l.b16 %v507
    %v579 = vunpack.c.l.b16 %v508
    %v580 = vunpack.c.l.b16 %v509
    %v581 = vunpack.c.l.b16 %v510
    %v582 = vunpack.c.l.b16 %v511
    %v583 = vunpack.c.l.b16 %v512
    %v584 = vunpack.c.l.b16 %v513
    %v585 = vunpack.c.l.b16 %v514
    %v586 = vunpack.c.l.b16 %v515
    %v587 = vunpack.c.l.b16 %v516
    %v588 = vunpack.c.l.b16 %v517
    %v589 = vunpack.c.l.b16 %v518
    %v590 = vunpack.c.l.b16 %v519
    %v591 = vunpack.c.l.b16 %v520
    %v592 = vunpack.c.l.b16 %v521
    %v593 = vunpack.c.l.b16 %v522
    %v594 = vunpack.c.l.b16 %v523
    %v595 = vpack.c.b16 %v564, %v563
    %v596 = vpack.c.b16 %v566, %v565
    %v597 = vpack.c.b16 %v568, %v567
    %v598 = vpack.c.b16 %v570, %v569
    %v599 = vpack.c.b16 %v572, %v571
    %v600 = vpack.c.b16 %v574, %v573
    %v601 = vpack.c.b16 %v576, %v575
    %v602 = vpack.c.b16 %v578, %v577
    %v603 = vpack.c.b16 %v580, %v579
    %v604 = vpack.c.b16 %v582, %v581
    %v605 = vpack.c.b16 %v584, %v583
    %v606 = vpack.c.b16 %v586, %v585
    %v607 = vpack.c.b16 %v588, %v587
    %v608 = vpack.c.b16 %v590, %v589
    %v609 = vpack.c.b16 %v592, %v591
    %v610 = vpack.c.b16 %v594, %v593
    %627 = vmatprep.subr.bf16.mxu0 0
    %628 = vmatpush1.bf16.msra.mxu0 %v595
    %629 = vmatprep.subr.bf16.mxu0 0
    %630 = vmatpush1.bf16.msra.mxu0 %v596
    %631 = vmatprep.subr.bf16.mxu0 0
    %632 = vmatpush1.bf16.msra.mxu0 %v597
    %633 = vmatprep.subr.bf16.mxu0 0
    %634 = vmatpush1.bf16.msra.mxu0 %v598
    %635 = vmatprep.subr.bf16.mxu0 0
    %636 = vmatpush1.bf16.msra.mxu0 %v599
    %637 = vmatprep.subr.bf16.mxu0 0
    %638 = vmatpush1.bf16.msra.mxu0 %v600
    %639 = vmatprep.subr.bf16.mxu0 0
    %640 = vmatpush1.bf16.msra.mxu0 %v601
    %641 = vmatprep.subr.bf16.mxu0 0
    %642 = vmatpush1.bf16.msra.mxu0 %v602
    %643 = vmatprep.subr.bf16.mxu0 0
    %644 = vmatpush1.bf16.msra.mxu0 %v603
    %645 = vmatprep.subr.bf16.mxu0 0
    %646 = vmatpush1.bf16.msra.mxu0 %v604
    %647 = vmatprep.subr.bf16.mxu0 0
    %648 = vmatpush1.bf16.msra.mxu0 %v605
    %649 = vmatprep.subr.bf16.mxu0 0
    %650 = vmatpush1.bf16.msra.mxu0 %v606
    %651 = vmatprep.subr.bf16.mxu0 0
    %652 = vmatpush1.bf16.msra.mxu0 %v607
    %653 = vmatprep.subr.bf16.mxu0 0
    %654 = vmatpush1.bf16.msra.mxu0 %v608
    %655 = vmatprep.subr.bf16.mxu0 0
    %656 = vmatpush1.bf16.msra.mxu0 %v609
    %657 = vmatprep.subr.bf16.mxu0 0
    %658 = vmatpush1.bf16.msra.mxu0 %v610
    %659 = vmatprep.mubr.bf16.mxu0 %v477
    %660 = vmatmul.mubr.bf16.gmra.mrb[0].mxu0 %v476
    %v661 = vpop.f32.mrb[0].mxu0
    %v662 = vadd.f32 %v529, %v661
    %v663 = vpop.f32.mrb[0].mxu0
    %v664 = vpop.f32.mrb[0].mxu0
    %v665 = vadd.f32 %v529, %v664
    %v666 = vpop.f32.mrb[0].mxu0
    %667 = vmatprep.mubr.bf16.mxu0 %v479
    %668 = vmatmul.mubr.bf16.gmra.mrb[0].mxu0 %v478
    %v669 = vpop.f32.mrb[0].mxu0
    %v670 = vadd.f32 %v529, %v669
    %v671 = vpop.f32.mrb[0].mxu0
    %v672 = vpop.f32.mrb[0].mxu0
    %v673 = vadd.f32 %v529, %v672
    %v674 = vpop.f32.mrb[0].mxu0
    %675 = vmatprep.mubr.bf16.mxu0 %v481
    %676 = vmatmul.mubr.bf16.gmra.mrb[0].mxu0 %v480
    %v677 = vpop.f32.mrb[0].mxu0
    %v678 = vadd.f32 %v529, %v677
    %v679 = vpop.f32.mrb[0].mxu0
    %v680 = vpop.f32.mrb[0].mxu0
    %v681 = vadd.f32 %v529, %v680
    %v682 = vpop.f32.mrb[0].mxu0
    %683 = vmatprep.mubr.bf16.mxu0 %v483
    %684 = vmatmul.mubr.bf16.gmra.mrb[0].mxu0 %v482
    %v685 = vpop.f32.mrb[0].mxu0
    %v686 = vadd.f32 %v529, %v685
    %v687 = vpop.f32.mrb[0].mxu0
    %v688 = vpop.f32.mrb[0].mxu0
    %v689 = vadd.f32 %v529, %v688
    %v690 = vpop.f32.mrb[0].mxu0
    %691 = vmatprep.mubr.bf16.mxu0 %v485
    %692 = vmatmul.mubr.bf16.gmra.mrb[0].mxu0 %v484
    %v693 = vpop.f32.mrb[0].mxu0
    %v694 = vadd.f32 %v529, %v693
    %v695 = vpop.f32.mrb[0].mxu0
    %v696 = vpop.f32.mrb[0].mxu0
    %v697 = vadd.f32 %v529, %v696
    %v698 = vpop.f32.mrb[0].mxu0
    %699 = vmatprep.mubr.bf16.mxu0 %v487
    %700 = vmatmul.mubr.bf16.gmra.mrb[0].mxu0 %v486
    %v701 = vpop.f32.mrb[0].mxu0
    %v702 = vadd.f32 %v529, %v701
    %v703 = vpop.f32.mrb[0].mxu0
    %v704 = vpop.f32.mrb[0].mxu0
    %v705 = vadd.f32 %v529, %v704
    %v706 = vpop.f32.mrb[0].mxu0
    %707 = vmatprep.mubr.bf16.mxu0 %v489
    %708 = vmatmul.mubr.bf16.gmra.mrb[0].mxu0 %v488
    %v709 = vpop.f32.mrb[0].mxu0
    %v710 = vadd.f32 %v529, %v709
    %v711 = vpop.f32.mrb[0].mxu0
    %v712 = vpop.f32.mrb[0].mxu0
    %v713 = vadd.f32 %v529, %v712
    %v714 = vpop.f32.mrb[0].mxu0
    %715 = vmatprep.mubr.bf16.mxu0 %v491
    %716 = vmatmul.mubr.bf16.gmra.mrb[0].mxu0 %v490
    %v717 = vpop.f32.mrb[0].mxu0
    %v718 = vadd.f32 %v529, %v717
    %v719 = vpop.f32.mrb[0].mxu0
    %v720 = vpop.f32.mrb[0].mxu0
    %v721 = vadd.f32 %v529, %v720
    %v722 = vpop.f32.mrb[0].mxu0
    %723 = vdwg.mxu0
    %v724 = vmax.f32 %v662, 0.0
    %v725 = vmax.f32 %v665, 0.0
    %v726 = vmax.f32 %v670, 0.0
    %v727 = vmax.f32 %v673, 0.0
    %v728 = vmax.f32 %v678, 0.0
    %v729 = vmax.f32 %v681, 0.0
    %v730 = vmax.f32 %v686, 0.0
    %v731 = vmax.f32 %v689, 0.0
    %v732 = vmax.f32 %v694, 0.0
    %v733 = vmax.f32 %v697, 0.0
    %v734 = vmax.f32 %v702, 0.0
    %v735 = vmax.f32 %v705, 0.0
    %v736 = vmax.f32 %v710, 0.0
    %v737 = vmax.f32 %v713, 0.0
    %v738 = vmax.f32 %v718, 0.0
    %v739 = vmax.f32 %v721, 0.0
    %v740 = vpack.c.bf16 %v725, %v724
    %v741 = vpack.c.bf16 %v727, %v726
    %v742 = vpack.c.bf16 %v729, %v728
    %v743 = vpack.c.bf16 %v731, %v730
    %v744 = vpack.c.bf16 %v733, %v732
    %v745 = vpack.c.bf16 %v735, %v734
    %v746 = vpack.c.bf16 %v737, %v736
    %v747 = vpack.c.bf16 %v739, %v738
    %v748 = vld [vmem:[%s3] sm:$0xf]
    %v749 = vld [vmem:[%s3 + $0x4] sm:$0xf]
    %v750 = vld [vmem:[%s3 + $0x8] sm:$0xf]
    %v751 = vld [vmem:[%s3 + $0xc] sm:$0xf]
    %v752 = vld [vmem:[%s4] sm:$0x1]
    %v754 = vlaneseq
    %v755 = vshrl.u32 %v754, 7
    %v756 = vsub.s32 0, %v755
    %v757 = vrot.slane %v752, %v756
    %v763 = vunpack.c.l.b16 %v748
    %v764 = vunpack.c.l.b16 %v749
    %v765 = vunpack.c.l.b16 %v750
    %v766 = vunpack.c.l.b16 %v751
    %v767 = vpack.c.b16 %v764, %v763
    %v768 = vpack.c.b16 %v766, %v765
    %vm771 = vcmask 261120
    %v773 = vsel %vm771, %v740, 0
    %v776 = vsel %vm771, %v741, 0
    %v779 = vsel %vm771, %v742, 0
    %v782 = vsel %vm771, %v743, 0
    %v785 = vsel %vm771, %v744, 0
    %v788 = vsel %vm771, %v745, 0
    %v791 = vsel %vm771, %v746, 0
    %v794 = vsel %vm771, %v747, 0
    %796 = vmatprep.subr.bf16.mxu0 0
    %797 = vmatpush1.bf16.msra.mxu0 %v767
    %798 = vmatprep.subr.bf16.mxu0 0
    %799 = vmatpush1.bf16.msra.mxu0 %v768
    %800 = vmatprep.subr.bf16.mxu0 0
    %801 = vmatpush1.bf16.msra.mxu0 0
    %802 = vmatprep.subr.bf16.mxu0 0
    %803 = vmatpush1.bf16.msra.mxu0 0
    %804 = vmatprep.subr.bf16.mxu0 0
    %805 = vmatpush1.bf16.msra.mxu0 0
    %806 = vmatprep.subr.bf16.mxu0 0
    %807 = vmatpush1.bf16.msra.mxu0 0
    %808 = vmatprep.subr.bf16.mxu0 0
    %809 = vmatpush1.bf16.msra.mxu0 0
    %810 = vmatprep.subr.bf16.mxu0 0
    %811 = vmatpush1.bf16.msra.mxu0 0
    %812 = vmatprep.subr.bf16.mxu0 0
    %813 = vmatpush1.bf16.msra.mxu0 0
    %814 = vmatprep.subr.bf16.mxu0 0
    %815 = vmatpush1.bf16.msra.mxu0 0
    %816 = vmatprep.subr.bf16.mxu0 0
    %817 = vmatpush1.bf16.msra.mxu0 0
    %818 = vmatprep.subr.bf16.mxu0 0
    %819 = vmatpush1.bf16.msra.mxu0 0
    %820 = vmatprep.subr.bf16.mxu0 0
    %821 = vmatpush1.bf16.msra.mxu0 0
    %822 = vmatprep.subr.bf16.mxu0 0
    %823 = vmatpush1.bf16.msra.mxu0 0
    %824 = vmatprep.subr.bf16.mxu0 0
    %825 = vmatpush1.bf16.msra.mxu0 0
    %826 = vmatprep.subr.bf16.mxu0 0
    %827 = vmatpush1.bf16.msra.mxu0 0
    %828 = vmatprep.mubr.bf16.mxu0 0
    %829 = vmatmul.mubr.bf16.gmra.mrb[0].mxu0 %v773
    %v830 = vpop.f32.mrb[0].mxu0
    %v831 = vadd.f32 %v757, %v830
    %v832 = vpop.f32.mrb[0].mxu0
    %v833 = vpop.f32.mrb[0].mxu0
    %v834 = vadd.f32 %v757, %v833
    %v835 = vpop.f32.mrb[0].mxu0
    %836 = vmatprep.mubr.bf16.mxu0 0
    %837 = vmatmul.mubr.bf16.gmra.mrb[0].mxu0 %v776
    %v838 = vpop.f32.mrb[0].mxu0
    %v839 = vadd.f32 %v757, %v838
    %v840 = vpop.f32.mrb[0].mxu0
    %v841 = vpop.f32.mrb[0].mxu0
    %v842 = vadd.f32 %v757, %v841
    %v843 = vpop.f32.mrb[0].mxu0
    %844 = vmatprep.mubr.bf16.mxu0 0
    %845 = vmatmul.mubr.bf16.gmra.mrb[0].mxu0 %v779
    %v846 = vpop.f32.mrb[0].mxu0
    %v847 = vadd.f32 %v757, %v846
    %v848 = vpop.f32.mrb[0].mxu0
    %v849 = vpop.f32.mrb[0].mxu0
    %v850 = vadd.f32 %v757, %v849
    %v851 = vpop.f32.mrb[0].mxu0
    %852 = vmatprep.mubr.bf16.mxu0 0
    %853 = vmatmul.mubr.bf16.gmra.mrb[0].mxu0 %v782
    %v854 = vpop.f32.mrb[0].mxu0
    %v855 = vadd.f32 %v757, %v854
    %v856 = vpop.f32.mrb[0].mxu0
    %v857 = vpop.f32.mrb[0].mxu0
    %v858 = vadd.f32 %v757, %v857
    %v859 = vpop.f32.mrb[0].mxu0
    %860 = vmatprep.mubr.bf16.mxu0 0
    %861 = vmatmul.mubr.bf16.gmra.mrb[0].mxu0 %v785
    %v862 = vpop.f32.mrb[0].mxu0
    %v863 = vadd.f32 %v757, %v862
    %v864 = vpop.f32.mrb[0].mxu0
    %v865 = vpop.f32.mrb[0].mxu0
    %v866 = vadd.f32 %v757, %v865
    %v867 = vpop.f32.mrb[0].mxu0
    %868 = vmatprep.mubr.bf16.mxu0 0
    %869 = vmatmul.mubr.bf16.gmra.mrb[0].mxu0 %v788
    %v870 = vpop.f32.mrb[0].mxu0
    %v871 = vadd.f32 %v757, %v870
    %v872 = vpop.f32.mrb[0].mxu0
    %v873 = vpop.f32.mrb[0].mxu0
    %v874 = vadd.f32 %v757, %v873
    %v875 = vpop.f32.mrb[0].mxu0
    %876 = vmatprep.mubr.bf16.mxu0 0
    %877 = vmatmul.mubr.bf16.gmra.mrb[0].mxu0 %v791
    %v878 = vpop.f32.mrb[0].mxu0
    %v879 = vadd.f32 %v757, %v878
    %v880 = vpop.f32.mrb[0].mxu0
    %v881 = vpop.f32.mrb[0].mxu0
    %v882 = vadd.f32 %v757, %v881
    %v883 = vpop.f32.mrb[0].mxu0
    %884 = vmatprep.mubr.bf16.mxu0 0
    %885 = vmatmul.mubr.bf16.gmra.mrb[0].mxu0 %v794
    %v886 = vpop.f32.mrb[0].mxu0
    %v887 = vadd.f32 %v757, %v886
    %v888 = vpop.f32.mrb[0].mxu0
    %v889 = vpop.f32.mrb[0].mxu0
    %v890 = vadd.f32 %v757, %v889
    %v891 = vpop.f32.mrb[0].mxu0
    %892 = vdwg.mxu0
    %v893 = vmax.f32 %v831, 0.0
    %v894 = vmax.f32 %v834, 0.0
    %v895 = vmax.f32 %v839, 0.0
    %v896 = vmax.f32 %v842, 0.0
    %v897 = vmax.f32 %v847, 0.0
    %v898 = vmax.f32 %v850, 0.0
    %v899 = vmax.f32 %v855, 0.0
    %v900 = vmax.f32 %v858, 0.0
    %v901 = vmax.f32 %v863, 0.0
    %v902 = vmax.f32 %v866, 0.0
    %v903 = vmax.f32 %v871, 0.0
    %v904 = vmax.f32 %v874, 0.0
    %v905 = vmax.f32 %v879, 0.0
    %v906 = vmax.f32 %v882, 0.0
    %v907 = vmax.f32 %v887, 0.0
    %v908 = vmax.f32 %v890, 0.0
    %v909 = vpack.c.bf16 %v894, %v893
    %v910 = vpack.c.bf16 %v896, %v895
    %v911 = vpack.c.bf16 %v898, %v897
    %v912 = vpack.c.bf16 %v900, %v899
    %v913 = vpack.c.bf16 %v902, %v901
    %v914 = vpack.c.bf16 %v904, %v903
    %v915 = vpack.c.bf16 %v906, %v905
    %v916 = vpack.c.bf16 %v908, %v907
    %v917 = vld [vmem:[%s5] sm:$0xf]
    %v918 = vld [vmem:[%s5 + $0x4] sm:$0xf]
    %v919 = vld [vmem:[%s5 + $0x8] sm:$0xf]
    %v920 = vld [vmem:[%s5 + $0xc] sm:$0xf]
    %v921 = vld [vmem:[%s5 + $0x10] sm:$0xf]
    %v922 = vld [vmem:[%s5 + $0x14] sm:$0xf]
    %v923 = vld [vmem:[%s5 + $0x18] sm:$0xf]
    %v924 = vld [vmem:[%s5 + $0x1c] sm:$0xf]
    %v925 = vld [vmem:[%s5 + $0x20] sm:$0xf]
    %v926 = vld [vmem:[%s5 + $0x24] sm:$0xf]
    %v927 = vld [vmem:[%s5 + $0x28] sm:$0xf]
    %v928 = vld [vmem:[%s5 + $0x2c] sm:$0xf]
    %v929 = vld [vmem:[%s5 + $0x30] sm:$0xf]
    %v930 = vld [vmem:[%s5 + $0x34] sm:$0xf]
    %v931 = vld [vmem:[%s5 + $0x38] sm:$0xf]
    %v932 = vld [vmem:[%s5 + $0x3c] sm:$0xf]
    %v933 = vld [vmem:[%s6] sm:$0xff]
    %v934 = vld [vmem:[%s6 + $0x8] sm:$0xff]
    %v935 = vld [vmem:[%s6 + $0x10] sm:$0xff]
    %v936 = vld [vmem:[%s6 + $0x18] sm:$0xff]
    %v937 = vld [vmem:[%s6 + $0x20] sm:$0xff]
    %v938 = vld [vmem:[%s6 + $0x28] sm:$0xff]
    %v939 = vld [vmem:[%s6 + $0x30] sm:$0xff]
    %v940 = vld [vmem:[%s6 + $0x38] sm:$0xff]
    %v941 = vld [vmem:[%s6 + $0x40] sm:$0xff]
    %v942 = vld [vmem:[%s6 + $0x48] sm:$0xff]
    %v943 = vld [vmem:[%s6 + $0x50] sm:$0xff]
    %v944 = vld [vmem:[%s6 + $0x58] sm:$0xff]
    %v945 = vld [vmem:[%s6 + $0x60] sm:$0xff]
    %v946 = vld [vmem:[%s6 + $0x68] sm:$0xff]
    %v947 = vld [vmem:[%s6 + $0x70] sm:$0xff]
    %v948 = vld [vmem:[%s6 + $0x78] sm:$0xff]
    %950 = vset.pattern.permute.xlu0 0
    %951 = vperm.xlu0 %950, %v933
    %v952 = vpop.permute.xlu0 %951
    %955 = vset.pattern.permute.xlu0 0
    %956 = vperm.xlu0 %955, %v934
    %v957 = vpop.permute.xlu0 %956
    %960 = vset.pattern.permute.xlu0 0
    %961 = vperm.xlu0 %960, %v935
    %v962 = vpop.permute.xlu0 %961
    %964 = vset.pattern.permute.xlu0 0
    %965 = vperm.xlu0 %964, %v936
    %v966 = vpop.permute.xlu0 %965
    %968 = vset.pattern.permute.xlu0 0
    %969 = vperm.xlu0 %968, %v937
    %v970 = vpop.permute.xlu0 %969
    %972 = vset.pattern.permute.xlu0 0
    %973 = vperm.xlu0 %972, %v938
    %v974 = vpop.permute.xlu0 %973
    %976 = vset.pattern.permute.xlu0 0
    %977 = vperm.xlu0 %976, %v939
    %v978 = vpop.permute.xlu0 %977
    %980 = vset.pattern.permute.xlu0 0
    %981 = vperm.xlu0 %980, %v940
    %v982 = vpop.permute.xlu0 %981
    %984 = vset.pattern.permute.xlu0 0
    %985 = vperm.xlu0 %984, %v941
    %v986 = vpop.permute.xlu0 %985
    %988 = vset.pattern.permute.xlu0 0
    %989 = vperm.xlu0 %988, %v942
    %v990 = vpop.permute.xlu0 %989
    %992 = vset.pattern.permute.xlu0 0
    %993 = vperm.xlu0 %992, %v943
    %v994 = vpop.permute.xlu0 %993
    %996 = vset.pattern.permute.xlu0 0
    %997 = vperm.xlu0 %996, %v944
    %v998 = vpop.permute.xlu0 %997
    %1000 = vset.pattern.permute.xlu0 0
    %1001 = vperm.xlu0 %1000, %v945
    %v1002 = vpop.permute.xlu0 %1001
    %1004 = vset.pattern.permute.xlu0 0
    %1005 = vperm.xlu0 %1004, %v946
    %v1006 = vpop.permute.xlu0 %1005
    %1008 = vset.pattern.permute.xlu0 0
    %1009 = vperm.xlu0 %1008, %v947
    %v1010 = vpop.permute.xlu0 %1009
    %1012 = vset.pattern.permute.xlu0 0
    %1013 = vperm.xlu0 %1012, %v948
    %v1014 = vpop.permute.xlu0 %1013
    %v1031 = vunpack.c.l.b16 %v917
    %v1032 = vunpack.c.l.b16 %v918
    %v1033 = vunpack.c.l.b16 %v919
    %v1034 = vunpack.c.l.b16 %v920
    %v1035 = vunpack.c.l.b16 %v921
    %v1036 = vunpack.c.l.b16 %v922
    %v1037 = vunpack.c.l.b16 %v923
    %v1038 = vunpack.c.l.b16 %v924
    %v1039 = vunpack.c.l.b16 %v925
    %v1040 = vunpack.c.l.b16 %v926
    %v1041 = vunpack.c.l.b16 %v927
    %v1042 = vunpack.c.l.b16 %v928
    %v1043 = vunpack.c.l.b16 %v929
    %v1044 = vunpack.c.l.b16 %v930
    %v1045 = vunpack.c.l.b16 %v931
    %v1046 = vunpack.c.l.b16 %v932
    %v1047 = vpack.c.b16 %v1032, %v1031
    %v1048 = vpack.c.b16 %v1034, %v1033
    %v1049 = vpack.c.b16 %v1036, %v1035
    %v1050 = vpack.c.b16 %v1038, %v1037
    %v1051 = vpack.c.b16 %v1040, %v1039
    %v1052 = vpack.c.b16 %v1042, %v1041
    %v1053 = vpack.c.b16 %v1044, %v1043
    %v1054 = vpack.c.b16 %v1046, %v1045
    %v1056 = vsel %vm771, %v1047, 0
    %v1059 = vsel %vm771, %v1048, 0
    %v1062 = vsel %vm771, %v1049, 0
    %v1065 = vsel %vm771, %v1050, 0
    %v1068 = vsel %vm771, %v1051, 0
    %v1071 = vsel %vm771, %v1052, 0
    %v1074 = vsel %vm771, %v1053, 0
    %v1077 = vsel %vm771, %v1054, 0
    %v1080 = vsel %vm771, %v909, 0
    %v1083 = vsel %vm771, %v910, 0
    %v1086 = vsel %vm771, %v911, 0
    %v1089 = vsel %vm771, %v912, 0
    %v1092 = vsel %vm771, %v913, 0
    %v1095 = vsel %vm771, %v914, 0
    %v1098 = vsel %vm771, %v915, 0
    %v1101 = vsel %vm771, %v916, 0
    %1103 = vmatprep.subr.bf16.mxu0 0
    %1104 = vmatpush1.bf16.xpose.msra.mxu0 %v1080
    %1105 = vmatprep.subr.bf16.mxu0 0
    %1106 = vmatpush1.bf16.xpose.msra.mxu0 %v1083
    %1107 = vmatprep.subr.bf16.mxu0 0
    %1108 = vmatpush1.bf16.xpose.msra.mxu0 %v1086
    %1109 = vmatprep.subr.bf16.mxu0 0
    %1110 = vmatpush1.bf16.xpose.msra.mxu0 %v1089
    %1111 = vmatprep.subr.bf16.mxu0 0
    %1112 = vmatpush1.bf16.xpose.msra.mxu0 %v1092
    %1113 = vmatprep.subr.bf16.mxu0 0
    %1114 = vmatpush1.bf16.xpose.msra.mxu0 %v1095
    %1115 = vmatprep.subr.bf16.mxu0 0
    %1116 = vmatpush1.bf16.xpose.msra.mxu0 %v1098
    %1117 = vmatprep.subr.bf16.mxu0 0
    %1118 = vmatpush1.bf16.xpose.msra.mxu0 %v1101
    %1119 = vmatprep.subr.bf16.mxu0 0
    %1120 = vmatpush1.bf16.xpose.msra.mxu0 0
    %1121 = vmatprep.subr.bf16.mxu0 0
    %1122 = vmatpush1.bf16.xpose.msra.mxu0 0
    %1123 = vmatprep.subr.bf16.mxu0 0
    %1124 = vmatpush1.bf16.xpose.msra.mxu0 0
    %1125 = vmatprep.subr.bf16.mxu0 0
    %1126 = vmatpush1.bf16.xpose.msra.mxu0 0
    %1127 = vmatprep.subr.bf16.mxu0 0
    %1128 = vmatpush1.bf16.xpose.msra.mxu0 0
    %1129 = vmatprep.subr.bf16.mxu0 0
    %1130 = vmatpush1.bf16.xpose.msra.mxu0 0
    %1131 = vmatprep.subr.bf16.mxu0 0
    %1132 = vmatpush1.bf16.xpose.msra.mxu0 0
    %1133 = vmatprep.subr.bf16.mxu0 0
    %1134 = vmatpush1.bf16.xpose.msra.mxu0 0
    %1135 = vmatprep.mubr.bf16.mxu0 0
    %1136 = vmatmul.mubr.bf16.gmra.mrb[0].mxu0 %v1056
    %v1137 = vpop.f32.mrb[0].mxu0
    %v1138 = vadd.f32 %v952, %v1137
    %v1139 = vpop.f32.mrb[0].mxu0
    %v1140 = vpop.f32.mrb[0].mxu0
    %v1141 = vadd.f32 %v957, %v1140
    %v1142 = vpop.f32.mrb[0].mxu0
    %1143 = vmatprep.mubr.bf16.mxu0 0
    %1144 = vmatmul.mubr.bf16.gmra.mrb[0].mxu0 %v1059
    %v1145 = vpop.f32.mrb[0].mxu0
    %v1146 = vpop.f32.mrb[0].mxu0
    %v1147 = vpop.f32.mrb[0].mxu0
    %v1148 = vpop.f32.mrb[0].mxu0
    %1149 = vmatprep.mubr.bf16.mxu0 0
    %1150 = vmatmul.mubr.bf16.gmra.mrb[0].mxu0 %v1062
    %v1151 = vpop.f32.mrb[0].mxu0
    %v1152 = vpop.f32.mrb[0].mxu0
    %v1153 = vpop.f32.mrb[0].mxu0
    %v1154 = vpop.f32.mrb[0].mxu0
    %1155 = vmatprep.mubr.bf16.mxu0 0
    %1156 = vmatmul.mubr.bf16.gmra.mrb[0].mxu0 %v1065
    %v1157 = vpop.f32.mrb[0].mxu0
    %v1158 = vpop.f32.mrb[0].mxu0
    %v1159 = vpop.f32.mrb[0].mxu0
    %v1160 = vpop.f32.mrb[0].mxu0
    %1161 = vmatprep.mubr.bf16.mxu0 0
    %1162 = vmatmul.mubr.bf16.gmra.mrb[0].mxu0 %v1068
    %v1163 = vpop.f32.mrb[0].mxu0
    %v1164 = vpop.f32.mrb[0].mxu0
    %v1165 = vpop.f32.mrb[0].mxu0
    %v1166 = vpop.f32.mrb[0].mxu0
    %1167 = vmatprep.mubr.bf16.mxu0 0
    %1168 = vmatmul.mubr.bf16.gmra.mrb[0].mxu0 %v1071
    %v1169 = vpop.f32.mrb[0].mxu0
    %v1170 = vpop.f32.mrb[0].mxu0
    %v1171 = vpop.f32.mrb[0].mxu0
    %v1172 = vpop.f32.mrb[0].mxu0
    %1173 = vmatprep.mubr.bf16.mxu0 0
    %1174 = vmatmul.mubr.bf16.gmra.mrb[0].mxu0 %v1074
    %v1175 = vpop.f32.mrb[0].mxu0
    %v1176 = vpop.f32.mrb[0].mxu0
    %v1177 = vpop.f32.mrb[0].mxu0
    %v1178 = vpop.f32.mrb[0].mxu0
    %1179 = vmatprep.mubr.bf16.mxu0 0
    %1180 = vmatmul.mubr.bf16.gmra.mrb[0].mxu0 %v1077
    %v1181 = vpop.f32.mrb[0].mxu0
    %v1182 = vpop.f32.mrb[0].mxu0
    %v1183 = vpop.f32.mrb[0].mxu0
    %v1184 = vpop.f32.mrb[0].mxu0
    %1185 = vdwg.mxu0
    %v1186 = vmax.f32 %v1138, %v1141
    %v1187 = vrot.slane %v1186, 4
    %v1188 = vmax.f32 %v1186, %v1187
    %v1189 = vrot.slane %v1188, 2
    %v1190 = vmax.f32 %v1188, %v1189
    %v1191 = vrot.slane %v1190, 1
    %v1192 = vmax.f32 %v1190, %v1191
    %v1193 = vsub.f32 %v1138, %v1192
    %v1194 = vsub.f32 %v1141, %v1192
    %v1195 = vmul.f32 %v1193, 1.442695
    %v1196 = vpow.pop %v1195
    %v1197 = vmul.f32 %v1194, 1.442695
    %v1198 = vpow.pop %v1197
    %v1199 = vadd.f32 %v1196, %v1198
    %v1200 = vrot.slane %v1199, 4
    %v1201 = vadd.f32 %v1199, %v1200
    %v1202 = vrot.slane %v1201, 2
    %v1203 = vadd.f32 %v1201, %v1202
    %v1204 = vrot.slane %v1203, 1
    %v1205 = vadd.f32 %v1203, %v1204
    %v1206 = vlog2.pop %v1205
    %v1207 = vmul.f32 %v1206, 0.6931472
    %v1208 = vadd.f32 %v1192, %v1207
    %1209 = vst [vmem:[#allocation2] sm:$0x1] %v1208
    // Predicated region
    $region30: #{tpu_custom_call.1} parent=1 // pred_check
      _
    $region31: #{tpu_custom_call.1} parent=1 // pred_check_branch
      %1211 = sbr.rel (0) target = $region33
    $region32: #{tpu_custom_call.1} parent=1 // pred_region
      %s1213 = ssub.s32 16, 16
      %1214 = vsyncadd [#allocation3], %s1213
      %s1216 = sshll.u32 [#allocation2], 4
      %s1217 = int_to_ptr.vmem [resolvable:$true] %s1216
      %1219 = dma.vmem_to_hbm [thread:$0]  %s1217, 16, %s7, [#allocation3]
    $region33: #{tpu_custom_call.1} parent=1 // pred_fallthru
      _
    // Predicated region
    $region34: #{tpu_custom_call.1} parent=1 // pred_check
      _
    $region35: #{tpu_custom_call.1} parent=1 // pred_check_branch
      %1221 = sbr.rel (0) target = $region37
    $region36: #{tpu_custom_call.1} parent=1 // pred_region
      %1222 = dma.done [#allocation3], 16
    $region37: #{tpu_custom_call.1} parent=1 // pred_fallthru
      _
    %1223 = vsyncpa [#allocation3], 1

</llo_original>
